<compile_context>
chip_gen: v7x
topology: tpu7x:2x2x1
jax: 0.10.0
libtpu: 0.0.40
codegen_flags: <defaults>
</compile_context>

<pallas_src>
import functools

import jax
import jax.numpy as jnp
from jax.experimental import pallas as pl
from jax.experimental.pallas import tpu as pltpu


# ----------------------------------------------------------------------------
# glue: bev shape helper + gen_indice_pairs (plain JAX, static shapes, padded)
# ----------------------------------------------------------------------------
def bev_spatial_shape(point_cloud_range, pillar_size):
    H = round((point_cloud_range[3] - point_cloud_range[0]) / pillar_size)
    W = round((point_cloud_range[4] - point_cloud_range[1]) / pillar_size)
    return int(W), int(H)


def gen_indice_pairs_jax(xyz, xyz_batch_cnt, pillar_size, spatial_shape, z_center):
    """Sort-based pillar discovery.

    Returns (pillars[N,3] byx zero-padded, pillar_centers[N,3] zero-padded,
    indice_pairs[N,1] compact pillar id (-1 if out of range), num_pillars).

    Pillars are numbered in ascending (b, y, x) flat order, matching the
    cumsum-over-BEV-grid numbering of the reference CUDA op, but without ever
    materializing the (B*H*W,) grid.
    """
    H, W = spatial_shape            # H = y cells, W = x cells (torch convention)
    B = int(xyz_batch_cnt.shape[0])
    N = xyz.shape[0]
    sentinel = B * H * W            # strictly greater than any valid flat id

    batch_idx = jnp.repeat(jnp.arange(B, dtype=jnp.int32), xyz_batch_cnt,
                           total_repeat_length=N)
    inv = jnp.float32(1.0 / pillar_size)
    # Same cell formula as the Pallas kernel (floor of x * 1/pillar_size).
    xid = jnp.floor(xyz[:, 0] * inv).astype(jnp.int32)
    yid = jnp.floor(xyz[:, 1] * inv).astype(jnp.int32)
    in_range = (xid >= 0) & (xid < W) & (yid >= 0) & (yid < H)

    flat = batch_idx * (H * W) + yid * W + xid
    flat = jnp.where(in_range, flat, sentinel).astype(jnp.int32)

    # Compaction by sorting (O(N log N), independent of BEV grid size).
    sorted_flat = jnp.sort(flat)
    prev = jnp.concatenate([jnp.full((1,), -1, jnp.int32), sorted_flat[:-1]])
    is_new = (sorted_flat != prev) & (sorted_flat < sentinel)
    slot = jnp.cumsum(is_new.astype(jnp.int32)) - 1        # compact id per sorted row
    num_pillars = jnp.sum(is_new.astype(jnp.int32))

    # Unique flat ids compacted to the front (ascending == pcdet scan order).
    unique_flat = jnp.full((N,), sentinel, jnp.int32).at[
        jnp.where(is_new, slot, N)].set(sorted_flat, mode="drop")

    valid_slot = jnp.arange(N, dtype=jnp.int32) < num_pillars
    uf = jnp.where(valid_slot, unique_flat, 0)
    pb = uf // (H * W)
    rem = uf % (H * W)
    py = rem // W
    px = rem % W
    pillars = jnp.stack([pb, py, px], axis=1).astype(jnp.int32)   # pad rows are 0

    pillar_centers = jnp.where(
        valid_slot[:, None],
        jnp.stack([(px.astype(jnp.float32) + 0.5) * pillar_size,
                   (py.astype(jnp.float32) + 0.5) * pillar_size,
                   jnp.full((N,), z_center, jnp.float32)], axis=1),
        0.0)

    # Per-point compact pillar id (K = 1); out-of-range points -> -1.
    pid = jnp.searchsorted(unique_flat, flat).astype(jnp.int32)
    indice_pairs = jnp.where(in_range, pid, -1).astype(jnp.int32)[:, None]
    return pillars, pillar_centers, indice_pairs, num_pillars


# ----------------------------------------------------------------------------
# Pallas kernel: analytic pillar-center + relative offset + passthrough concat
# (channel-major: channels on sublanes, points on lanes)
# ----------------------------------------------------------------------------
def _group_kernel(pf_ref, xyz_ref, out_ref, *, C, inv_pillar_size, pillar_size,
                  z_center):
    xyz = xyz_ref[...]                              # (3, TN)  f32
    xy = xyz[0:2, :]                                # (2, TN)
    z = xyz[2:3, :]                                 # (1, TN)

    # Analytic pillar center (pure VPU math, no gather):
    #   center_xy = (floor(xy / pillar_size) + 0.5) * pillar_size
    #   center_z  = z_center
    centers_xy = (jnp.floor(xy * inv_pillar_size) + 0.5) * pillar_size

    # Sublane-row stores, full 128-lane width (unmasked vst in the lane dim).
    out_ref[0:C, :] = pf_ref[...]                   # passthrough point features
    out_ref[C:C + 3, :] = xyz                       # passthrough xyz
    out_ref[C + 3:C + 5, :] = xy - centers_xy       # rel x, y
    out_ref[C + 5:C + 6, :] = z - z_center          # rel z


def _round_up(x, m):
    return ((x + m - 1) // m) * m


def _pick_tn(N, tn_max=32768):
    """Lane tile: multiple of 128, large (amortize ~0.35us/step), and keeping
    >= 2 grid steps whenever N > 128 so ("parallel",) can shard across the two
    v7x TensorCores."""
    if N <= 128:
        return 128
    return int(min(tn_max, _round_up(pl.cdiv(N, 2), 128)))


def pallas_group_features_t(point_features, xyz, pillar_size, z_center,
                            tn_max=32768):
    """Returns group_features.T of shape (C+6, N):
       rows [0:C]   = point_features
       rows [C:C+3] = xyz
       rows [C+3:]  = xyz - pillar_center(xyz)
    """
    N, C = point_features.shape
    # Channel-major / lane-dense presentation (layout plumbing only).
    pf_t = point_features.T.astype(jnp.float32)     # (C, N)
    xyz_t = xyz.T.astype(jnp.float32)               # (3, N)

    tn = _pick_tn(N, tn_max)
    grid = pl.cdiv(N, tn)                           # ragged last block handled
                                                    # by Pallas (no pad / slice)

    kernel = functools.partial(
        _group_kernel, C=C,
        inv_pillar_size=float(1.0 / pillar_size),
        pillar_size=float(pillar_size),
        z_center=float(z_center))

    out_t = pl.pallas_call(
        kernel,
        out_shape=jax.ShapeDtypeStruct((C + 6, N), jnp.float32),
        grid_spec=pl.GridSpec(
            grid=(grid,),
            in_specs=[
                pl.BlockSpec((C, tn), lambda i: (0, i)),       # pf.T tile
                pl.BlockSpec((3, tn), lambda i: (0, i)),       # xyz.T tile
            ],
            out_specs=pl.BlockSpec((C + 6, tn), lambda i: (0, i)),
        ),
        compiler_params=pltpu.CompilerParams(
            dimension_semantics=("parallel",)),                # 2-TC sharding on v7x
    )(pf_t, xyz_t)
    return out_t


# ----------------------------------------------------------------------------
# Module wrapper (no learned parameters in this module)
# ----------------------------------------------------------------------------
class PillarQueryAndGroupPallas:
    def __init__(self, pillar_size, point_cloud_range):
        self.pillar_size = pillar_size
        self.spatial_shape = bev_spatial_shape(point_cloud_range, pillar_size)
        self.z_center = (point_cloud_range[5] + point_cloud_range[2]) / 2
        self.point_cloud_range = point_cloud_range

    def __call__(self, xyz, xyz_batch_cnt, point_features):
        pillars, pillar_centers, indice_pairs, num_pillars = gen_indice_pairs_jax(
            xyz, xyz_batch_cnt, self.pillar_size, self.spatial_shape, self.z_center)
        # TODO(synk): flatten_indices drops points whose pillar id is -1
        # (dynamic output length).  Here all points are kept (L == N); rows with
        # pillar_set_indices == -1 must be masked by the downstream scatter.
        pillar_set_indices = indice_pairs[:, 0]

        gf_t = pallas_group_features_t(
            point_features, xyz, self.pillar_size, self.z_center)
        # Preserve the reference (N, C+6) row-major output layout.
        # TODO(synk): if the downstream pillar MLP can consume the channel-major
        # (C+6, N) slab directly (or pf / xyz / rel as three operands), return
        # gf_t and drop this transpose to remove the passthrough HBM traffic.
        group_features = gf_t.T
        return pillars, pillar_set_indices, group_features, num_pillars, pillar_centers


# ----------------------------------------------------------------------------
if __name__ == "__main__":
    key = jax.random.PRNGKey(0)
    k1, k2, k3 = jax.random.split(key, 3)

    # small synthetic setup: B=2, 120 points per sample (N=240, exercises the
    # ragged last block), C=4 features, pillar grid 8x8 (pillar_size=1.0,
    # pc_range [0,0,-1, 8,8,3])
    B, n_per, C = 2, 120, 4
    N = B * n_per
    pillar_size = 1.0
    point_cloud_range = [0.0, 0.0, -1.0, 8.0, 8.0, 3.0]

    xy = jax.random.uniform(k1, (N, 2), minval=0.0, maxval=7.999,
                            dtype=jnp.float32)
    z = jax.random.uniform(k2, (N, 1), minval=-1.0, maxval=3.0,
                           dtype=jnp.float32)
    xyz = jnp.concatenate([xy, z], axis=1)                       # (N, 3) relative coords
    xyz_batch_cnt = jnp.array([n_per, n_per], dtype=jnp.int32)   # (B,)
    point_features = jax.random.normal(k3, (N, C), dtype=jnp.float32)

    module = PillarQueryAndGroupPallas(pillar_size, point_cloud_range)
    pillars, pillar_set_indices, group_features, num_pillars, pillar_centers = module(
        xyz, xyz_batch_cnt, point_features)
    jax.block_until_ready(group_features)

    # plain-JAX reference of the grouping hot path (exact compacted-index gather)
    ref = jnp.concatenate(
        [point_features, xyz, xyz - pillar_centers[pillar_set_indices]], axis=1)
    assert group_features.shape == (N, C + 6)
    assert jnp.allclose(group_features, ref, atol=1e-5), "mismatch vs reference"
    assert int(num_pillars) > 0 and int(num_pillars) <= N
    assert bool(jnp.all(pillar_set_indices >= 0))
    assert bool(jnp.all(pillar_set_indices < num_pillars))

    print("KERNEL_OK")
</pallas_src>

<mosaic_0001>
module attributes {stable_mosaic.version = 11 : i64} {
  func.func @_group_kernel(%arg0: i32, %arg1: memref<4x128xf32, #tpu.memory_space<vmem>>, %arg2: memref<3x128xf32, #tpu.memory_space<vmem>>, %arg3: memref<10x128xf32, #tpu.memory_space<vmem>>) attributes {dimension_semantics = [#tpu.dimension_semantics<parallel>], iteration_bounds = array<i64: 2>, scalar_prefetch = 0 : i64, scratch_operands = 0 : i64, tpu.core_type = #tpu.core_type<tc>, window_params = [{transform_indices = @transform_0, window_bounds = array<i64: 4, 128>}, {transform_indices = @transform_1, window_bounds = array<i64: 3, 128>}, {transform_indices = @transform_2, window_bounds = array<i64: 10, 128>}]} {
    %c0 = arith.constant 0 : index
    %c0_0 = arith.constant 0 : index
    %0 = vector.load %arg2[%c0, %c0_0] : memref<3x128xf32, #tpu.memory_space<vmem>>, vector<3x128xf32>
    %1 = vector.extract_strided_slice %0 {offsets = [0, 0], sizes = [2, 128], strides = [1, 1]} : vector<3x128xf32> to vector<2x128xf32>
    %2 = vector.extract_strided_slice %0 {offsets = [2, 0], sizes = [1, 128], strides = [1, 1]} : vector<3x128xf32> to vector<1x128xf32>
    %cst = arith.constant 1.000000e+00 : f32
    %3 = vector.broadcast %cst : f32 to vector<2x128xf32>
    %4 = arith.mulf %1, %3 : vector<2x128xf32>
    %5 = math.floor %4 : vector<2x128xf32>
    %cst_1 = arith.constant 5.000000e-01 : f32
    %6 = vector.broadcast %cst_1 : f32 to vector<2x128xf32>
    %7 = arith.addf %5, %6 : vector<2x128xf32>
    %cst_2 = arith.constant 1.000000e+00 : f32
    %8 = vector.broadcast %cst_2 : f32 to vector<2x128xf32>
    %9 = arith.mulf %7, %8 : vector<2x128xf32>
    %c0_3 = arith.constant 0 : index
    %c0_4 = arith.constant 0 : index
    %10 = vector.load %arg1[%c0_3, %c0_4] : memref<4x128xf32, #tpu.memory_space<vmem>>, vector<4x128xf32>
    %c0_5 = arith.constant 0 : index
    %c0_6 = arith.constant 0 : index
    %11 = vector.load %arg3[%c0_5, %c0_6] : memref<10x128xf32, #tpu.memory_space<vmem>>, vector<4x128xf32>
    tpu.vector_store %arg3[%c0_5, %c0_6], %10 {strides = array<i32>} : memref<10x128xf32, #tpu.memory_space<vmem>>, vector<4x128xf32>,
    %c4 = arith.constant 4 : index
    %c0_7 = arith.constant 0 : index
    %12 = vector.load %arg3[%c4, %c0_7] : memref<10x128xf32, #tpu.memory_space<vmem>>, vector<3x128xf32>
    tpu.vector_store %arg3[%c4, %c0_7], %0 {strides = array<i32>} : memref<10x128xf32, #tpu.memory_space<vmem>>, vector<3x128xf32>,
    %13 = arith.subf %1, %9 : vector<2x128xf32>
    %c7 = arith.constant 7 : index
    %c0_8 = arith.constant 0 : index
    %14 = vector.load %arg3[%c7, %c0_8] : memref<10x128xf32, #tpu.memory_space<vmem>>, vector<2x128xf32>
    tpu.vector_store %arg3[%c7, %c0_8], %13 {strides = array<i32>} : memref<10x128xf32, #tpu.memory_space<vmem>>, vector<2x128xf32>,
    %cst_9 = arith.constant 1.000000e+00 : f32
    %15 = vector.broadcast %cst_9 : f32 to vector<1x128xf32>
    %16 = arith.subf %2, %15 : vector<1x128xf32>
    %c9 = arith.constant 9 : index
    %c0_10 = arith.constant 0 : index
    %17 = vector.load %arg3[%c9, %c0_10] : memref<10x128xf32, #tpu.memory_space<vmem>>, vector<1x128xf32>
    tpu.vector_store %arg3[%c9, %c0_10], %16 {strides = array<i32>} : memref<10x128xf32, #tpu.memory_space<vmem>>, vector<1x128xf32>,
    return
  }
  func.func @transform_0(%arg0: i32) -> (i32, i32) {
    %c0_i32 = arith.constant 0 : i32
    %c0_i32_0 = arith.constant 0 : i32
    return %c0_i32, %arg0 : i32, i32
  }
  func.func @transform_1(%arg0: i32) -> (i32, i32) {
    %c0_i32 = arith.constant 0 : i32
    %c0_i32_0 = arith.constant 0 : i32
    return %c0_i32, %arg0 : i32, i32
  }
  func.func @transform_2(%arg0: i32) -> (i32, i32) {
    %c0_i32 = arith.constant 0 : i32
    %c0_i32_0 = arith.constant 0 : i32
    return %c0_i32, %arg0 : i32, i32
  }
}

</mosaic_0001>

<llo_original>
// kernel: tpu_custom_call.1
$region0: #{tpu_custom_call.1}
  #allocation0 [shape = 'u32[]', space=smem, size = 0x4, offset = 0x4, fixed_abs, tag = 'smem constant byte address 0x4 - core index']
  #allocation1 [shape = 'u32[144,128]{1,0:T(1,128)}', space=vmem, size = 0x12000, scoped, tag = 'internal scratch']
  %s0 = inlined_call_operand.hbm [shape: f32[4,240], index: 0, kind: input, shape index: {}]
  %s1 = inlined_call_operand.hbm [shape: f32[3,240], index: 1, kind: input, shape index: {}]
  %s2 = inlined_call_operand.hbm [shape: f32[10,240], index: 2, kind: output, shape index: {}]
  %s3 = sld [smem:[#allocation0]]
  $region49: #{tpu_custom_call.1} parent=0
    _
  %s5 = ssub.s32 1, %s3
  %s6 = scalar_select 0, %s5, %s3
  $region1: #{tpu_custom_call.1} parent=0
    #allocation2 [shape = 'u8[4096]{0}', space=vmem, size = 0x1000, scoped, tag = 'input window, operand 0']
    #allocation3 [shape = 's32[2]{0}', space=sflag, size = 0x8, scoped, tag = 'scoped memory for tpu_custom_call.1']
    #allocation4 [shape = 's32[2]{0}', space=sflag, size = 0x8, scoped, tag = 'scoped memory for tpu_custom_call.1']
    #allocation5 [shape = 'u8[4096]{0}', space=vmem, size = 0x1000, scoped, tag = 'input window, operand 1']
    #allocation6 [shape = 's32[2]{0}', space=sflag, size = 0x8, scoped, tag = 'scoped memory for tpu_custom_call.1']
    #allocation7 [shape = 'u8[16384]{0}', space=vmem, size = 0x4000, scoped, tag = 'output window, operand 0']
    %7 = vsyncpa [#allocation3], 0
    %s8 = scalar_lea.sflag [#allocation3], 1
    %9 = vsyncpa %s8, 0
    %10 = vsyncpa [#allocation6], 0
    %s11 = scalar_lea.sflag [#allocation6], 1
    %12 = vsyncpa %s11, 0
    %13 = vsyncpa [#allocation4], 0
    %s14 = scalar_lea.sflag [#allocation4], 1
    %15 = vsyncpa %s14, 0
    loop: start=0, step=1, limit=4
    $region2: #{tpu_custom_call.1} parent=1 // loop_pre_header
      _
    $region3: #{tpu_custom_call.1} parent=1 // loop_header
      %s17 = sphi 0, %s21
      %p18 = scmp.ge.s32.totalorder %s17, 4
      %s27 = sphi 0, %s29
      %s30 = sphi 0, %s27
      %s31 = sphi 0, %s30
      %s47 = sphi 0, %s31
      %s53 = sphi 0, %s55
      %s56 = sphi 0, %s53
      %s57 = sphi 0, %s56
      %s73 = sphi 0, %s57
      %s79 = sphi 0, %s81
      %s82 = sphi 0, %s79
      %s83 = sphi 0, %s82
      %s99 = sphi 0, %s83
    $region4: #{tpu_custom_call.1} parent=1 // loop_header_branch
      %20 = sbr.rel (%p18) target = $region8
    $region5: #{tpu_custom_call.1} parent=1 // loop_body
      %s22 = ssub.s32 %s17, 1
      %s23 = ssub.s32 %s17, 2
      %s24 = sadd.s32 %s17, 1
      %s25 = ssub.s32 %s17, %s24
      %p26 = scmp.eq.s32.totalorder %s25, 0
      %s28 = sadd.s32 %s27, 1
      %s29 = scalar_select %p26, %s27, %s28
      %p32 = pneg %p26
      %p33 = scmp.eq.s32.totalorder %s17, 1
      %p34 = por %p32, %p33
      %p35 = scmp.ne.s32.totalorder %s27, %s30
      %p36 = scmp.eq.s32.totalorder %s17, 0
      %p37 = por %p35, %p36
      %p38 = scmp.ne.s32.totalorder %s27, %s30
      %p39 = scmp.eq.s32.totalorder %s22, 1
      %p40 = por %p38, %p39
      %p41 = scmp.ne.s32.totalorder %s30, %s31
      %p42 = scmp.eq.s32.totalorder %s22, 0
      %p43 = por %p41, %p42
      %p44 = scmp.ne.s32.totalorder %s30, %s31
      %p45 = scmp.eq.s32.totalorder %s23, 1
      %p46 = por %p44, %p45
      %p48 = scmp.ne.s32.totalorder %s31, %s47
      %p49 = scmp.eq.s32.totalorder %s23, 0
      %p50 = por %p48, %p49
      %s51 = ssub.s32 %s17, %s24
      %p52 = scmp.eq.s32.totalorder %s51, 0
      %s54 = sadd.s32 %s53, 1
      %s55 = scalar_select %p52, %s53, %s54
      %p58 = pneg %p52
      %p59 = scmp.eq.s32.totalorder %s17, 1
      %p60 = por %p58, %p59
      %p61 = scmp.ne.s32.totalorder %s53, %s56
      %p62 = scmp.eq.s32.totalorder %s17, 0
      %p63 = por %p61, %p62
      %p64 = scmp.ne.s32.totalorder %s53, %s56
      %p65 = scmp.eq.s32.totalorder %s22, 1
      %p66 = por %p64, %p65
      %p67 = scmp.ne.s32.totalorder %s56, %s57
      %p68 = scmp.eq.s32.totalorder %s22, 0
      %p69 = por %p67, %p68
      %p70 = scmp.ne.s32.totalorder %s56, %s57
      %p71 = scmp.eq.s32.totalorder %s23, 1
      %p72 = por %p70, %p71
      %p74 = scmp.ne.s32.totalorder %s57, %s73
      %p75 = scmp.eq.s32.totalorder %s23, 0
      %p76 = por %p74, %p75
      %s77 = ssub.s32 %s17, %s24
      %p78 = scmp.eq.s32.totalorder %s77, 0
      %s80 = sadd.s32 %s79, 1
      %s81 = scalar_select %p78, %s79, %s80
      %p84 = pneg %p78
      %p85 = scmp.eq.s32.totalorder %s17, 1
      %p86 = por %p84, %p85
      %p87 = scmp.ne.s32.totalorder %s79, %s82
      %p88 = scmp.eq.s32.totalorder %s17, 0
      %p89 = por %p87, %p88
      %p90 = scmp.ne.s32.totalorder %s79, %s82
      %p91 = scmp.eq.s32.totalorder %s22, 1
      %p92 = por %p90, %p91
      %p93 = scmp.ne.s32.totalorder %s82, %s83
      %p94 = scmp.eq.s32.totalorder %s22, 0
      %p95 = por %p93, %p94
      %p96 = scmp.ne.s32.totalorder %s82, %s83
      %p97 = scmp.eq.s32.totalorder %s23, 1
      %p98 = por %p96, %p97
      %p100 = scmp.ne.s32.totalorder %s83, %s99
      %p101 = scmp.eq.s32.totalorder %s23, 0
      %p102 = por %p100, %p101
      %p103 = scmp.le.s32.totalorder 1, %s17
      %p104 = scmp.lt.s32.totalorder %s17, 3
      %p105 = pnand %p103, %p104
      %p106 = pneg %p105
      // Predicated region
      $region9: #{tpu_custom_call.1} parent=5 // pred_check
        _
      $region10: #{tpu_custom_call.1} parent=5 // pred_check_branch
        %108 = sbr.rel (%p105) target = $region12
      $region11: #{tpu_custom_call.1} parent=5 // pred_region
        %s109 = ssub.s32 %s17, 1
      $region12: #{tpu_custom_call.1} parent=5 // pred_fallthru
        _
      %p110 = scmp.lt.s32.totalorder %s17, 2
      // Predicated region
      $region13: #{tpu_custom_call.1} parent=5 // pred_check
        %p111 = pneg %p110
      $region14: #{tpu_custom_call.1} parent=5 // pred_check_branch
        %113 = sbr.rel (%p111) target = $region16
      $region15: #{tpu_custom_call.1} parent=5 // pred_region
        // Predicated region
        $region17: #{tpu_custom_call.1} parent=15 // pred_check
          %p114 = pneg %p37
        $region18: #{tpu_custom_call.1} parent=15 // pred_check_branch
          %116 = sbr.rel (%p114) target = $region20
        $region19: #{tpu_custom_call.1} parent=15 // pred_region
          %s117 = sand.u32 %s27, 1
          %s118 = scalar_lea.sflag [#allocation3], %s117
          %s119 = sand.u32 %s27, 1
          %s120 = smul.addr %s119, 4
          %s121 = scalar_lea.vmem [#allocation2], %s120
          %s123 = ssub.s32 64, 64
          %124 = vsyncadd %s118, %s123
          %s125 = smul.addr %s17, 64
          %s126 = scalar_lea.hbm %s0, %s125
          %s128 = sshll.u32 %s121, 4
          %s129 = int_to_ptr.vmem [resolvable:$true] %s128
          %131 = dma.hbm_to_vmem [thread:$0]  %s126, 64, %s129, %s118
        $region20: #{tpu_custom_call.1} parent=15 // pred_fallthru
          _
        // Predicated region
        $region21: #{tpu_custom_call.1} parent=15 // pred_check
          %p132 = pneg %p63
        $region22: #{tpu_custom_call.1} parent=15 // pred_check_branch
          %134 = sbr.rel (%p132) target = $region24
        $region23: #{tpu_custom_call.1} parent=15 // pred_region
          %s135 = sand.u32 %s53, 1
          %s136 = scalar_lea.sflag [#allocation6], %s135
          %s137 = sand.u32 %s53, 1
          %s138 = smul.addr %s137, 4
          %s139 = scalar_lea.vmem [#allocation5], %s138
          %s141 = ssub.s32 64, 64
          %142 = vsyncadd %s136, %s141
          %s143 = smul.addr %s17, 64
          %s144 = scalar_lea.hbm %s1, %s143
          %s146 = sshll.u32 %s139, 4
          %s147 = int_to_ptr.vmem [resolvable:$true] %s146
          %149 = dma.hbm_to_vmem [thread:$0]  %s144, 64, %s147, %s136
        $region24: #{tpu_custom_call.1} parent=15 // pred_fallthru
          _
      $region16: #{tpu_custom_call.1} parent=5 // pred_fallthru
        _
      %p150 = scmp.le.s32.totalorder 1, %s17
      %p151 = scmp.lt.s32.totalorder %s17, 3
      %p152 = pnand %p150, %p151
      %p153 = pneg %p152
      // Predicated region
      $region25: #{tpu_custom_call.1} parent=5 // pred_check
        _
      $region26: #{tpu_custom_call.1} parent=5 // pred_check_branch
        %155 = sbr.rel (%p152) target = $region28
      $region27: #{tpu_custom_call.1} parent=5 // pred_region
        %s156 = ssub.s32 %s17, 1
        %s157 = sand.u32 %s30, 1
        %s158 = scalar_lea.sflag [#allocation3], %s157
        %s159 = sand.u32 %s30, 1
        %s160 = smul.addr %s159, 4
        %s161 = scalar_lea.vmem [#allocation2], %s160
        // Predicated region
        $region29: #{tpu_custom_call.1} parent=27 // pred_check
          %p162 = pneg %p43
        $region30: #{tpu_custom_call.1} parent=27 // pred_check_branch
          %164 = sbr.rel (%p162) target = $region32
        $region31: #{tpu_custom_call.1} parent=27 // pred_region
          %165 = dma.done %s158, 64
        $region32: #{tpu_custom_call.1} parent=27 // pred_fallthru
          _
        %s166 = sand.u32 %s56, 1
        %s167 = scalar_lea.sflag [#allocation6], %s166
        %s168 = sand.u32 %s56, 1
        %s169 = smul.addr %s168, 4
        %s170 = scalar_lea.vmem [#allocation5], %s169
        // Predicated region
        $region33: #{tpu_custom_call.1} parent=27 // pred_check
          %p171 = pneg %p69
        $region34: #{tpu_custom_call.1} parent=27 // pred_check_branch
          %173 = sbr.rel (%p171) target = $region36
        $region35: #{tpu_custom_call.1} parent=27 // pred_region
          %174 = dma.done %s167, 64
        $region36: #{tpu_custom_call.1} parent=27 // pred_fallthru
          _
        %s175 = sand.u32 %s30, 1
        %s176 = scalar_lea.sflag [#allocation3], %s175
        %s177 = sand.u32 %s30, 1
        %s178 = smul.addr %s177, 4
        %s179 = scalar_lea.vmem [#allocation2], %s178
        %p180 = pneg %p43
        %p181 = pneg %p40
        %s182 = sand.u32 %s56, 1
        %s183 = scalar_lea.sflag [#allocation6], %s182
        %s184 = sand.u32 %s56, 1
        %s185 = smul.addr %s184, 4
        %s186 = scalar_lea.vmem [#allocation5], %s185
        %p187 = pneg %p69
        %p188 = pneg %p66
        %p189 = pneg %p95
        %p190 = pneg %p92
        %s191 = sand.u32 %s82, 1
        %s192 = scalar_lea.sflag [#allocation4], %s191
        %s193 = sand.u32 %s82, 1
        %s194 = smul.addr %s193, 16
        %s195 = scalar_lea.vmem [#allocation7], %s194
        %v196 = vld [vmem:[%s170] sm:$0x7]
        %v197 = vfloor.f32 %v196
        %v198 = vadd.f32 %v197, 0.5
        %v199 = vld [vmem:[%s161] sm:$0xf]
        %200 = vst [vmem:[%s195] sm:$0xf] %v199
        %201 = vst [vmem:[%s195 + $0x4] sm:$0x7] %v196
        %v202 = vsub.f32 %v196, %v198
        %203 = vst [vmem:[%s195 + $0x7] sm:$0x3] %v202
        %v204 = vsub.f32 %v196, 1.0
        %205 = vst [vmem:[%s195 + $0x7] sm:$0x4] %v204
        %s206 = sand.u32 %s82, 1
        %s207 = scalar_lea.sflag [#allocation4], %s206
        %s208 = sand.u32 %s82, 1
        %s209 = smul.addr %s208, 16
        %s210 = scalar_lea.vmem [#allocation7], %s209
        // Predicated region
        $region37: #{tpu_custom_call.1} parent=27 // pred_check
          %p211 = pneg %p92
        $region38: #{tpu_custom_call.1} parent=27 // pred_check_branch
          %213 = sbr.rel (%p211) target = $region40
        $region39: #{tpu_custom_call.1} parent=27 // pred_region
          %s215 = ssub.s32 256, 256
          %216 = vsyncadd %s207, %s215
          %s217 = smul.addr %s22, 128
          %s218 = scalar_lea.hbm %s2, %s217
          %s219 = sshll.u32 %s210, 4
          %s220 = int_to_ptr.vmem [resolvable:$true] %s219
          %225 = dma.vmem_to_hbm [thread:$0]  %s220, 256, %s218, %s207, 128, 256, 8
        $region40: #{tpu_custom_call.1} parent=27 // pred_fallthru
          _
      $region28: #{tpu_custom_call.1} parent=5 // pred_fallthru
        _
      %p226 = scmp.le.s32.totalorder 2, %s17
      // Predicated region
      $region41: #{tpu_custom_call.1} parent=5 // pred_check
        %p227 = pneg %p226
      $region42: #{tpu_custom_call.1} parent=5 // pred_check_branch
        %229 = sbr.rel (%p227) target = $region44
      $region43: #{tpu_custom_call.1} parent=5 // pred_region
        %s230 = ssub.s32 %s17, 2
        // Predicated region
        $region45: #{tpu_custom_call.1} parent=43 // pred_check
          %p231 = pneg %p98
        $region46: #{tpu_custom_call.1} parent=43 // pred_check_branch
          %233 = sbr.rel (%p231) target = $region48
        $region47: #{tpu_custom_call.1} parent=43 // pred_region
          %s234 = sand.u32 %s83, 1
          %s235 = scalar_lea.sflag [#allocation4], %s234
          %s236 = sand.u32 %s83, 1
          %s237 = smul.addr %s236, 16
          %s238 = scalar_lea.vmem [#allocation7], %s237
          %239 = dma.done %s235, 256
        $region48: #{tpu_custom_call.1} parent=43 // pred_fallthru
          _
      $region44: #{tpu_custom_call.1} parent=5 // pred_fallthru
        _
    $region6: #{tpu_custom_call.1} parent=1 // loop_footer
      %s21 = sadd.s32 1, %s17
    $region7: #{tpu_custom_call.1} parent=1 // loop_footer_branch
      %16 = sbr.rel target = $region3
    $region8: #{tpu_custom_call.1} parent=1 // loop_exit
      _
    %240 = vsyncpa [#allocation3], 1
    %s241 = scalar_lea.sflag [#allocation3], 1
    %242 = vsyncpa %s241, 1
    %243 = vsyncpa [#allocation6], 1
    %s244 = scalar_lea.sflag [#allocation6], 1
    %245 = vsyncpa %s244, 1
    %246 = vsyncpa [#allocation4], 1
    %s247 = scalar_lea.sflag [#allocation4], 1
    %248 = vsyncpa %s247, 1

</llo_original>
